<compile_context>
chip_gen: v7x
topology: tpu7x:2x2x1
jax: 0.10.0
libtpu: 0.0.40
codegen_flags: <defaults>
</compile_context>

<pallas_src>
import functools

import numpy as np
import jax
import jax.numpy as jnp
from jax import lax
from jax.experimental import pallas as pl
from jax.experimental.pallas import tpu as pltpu


def default_postprocess(x):  # default_postprocess_script
    return x


_SQRT_EPS = float(np.sqrt(np.float32(1e-30)))  # zeroed diag after clamp+sqrt
_VMEM_BUDGET = 24 * 1024 * 1024                # per-step double-buffered bytes


# ----------------------------------------------------------------------------
# Tiling helpers
# ----------------------------------------------------------------------------
def _sublane_align(itemsize):
    return max(8, 32 // int(itemsize))


def _round_up(x, m):
    return ((x + m - 1) // m) * m


def _split_dim(n, target, align):
    """Return (tile, padded_n): tile is a multiple of `align`, padded_n a
    multiple of tile; padding is minimized for the chosen number of tiles."""
    if n <= target:
        t = _round_up(n, align)
        return t, t
    ntiles = -(-n // target)
    t = _round_up(-(-n // ntiles), align)
    return t, t * ntiles


def _choose_full_tiles(n, m, d, itemsize):
    """Pick (tile_n, tile_m, padded_n, padded_m, est_bytes) for the full
    (squared-)distance kernel under the VMEM working-set budget."""
    sub = _sublane_align(itemsize)
    tn_t, tm_t = 512, 1024
    while True:
        tn, n_pad = _split_dim(n, tn_t, sub)
        tm, m_pad = _split_dim(m, tm_t, 128)
        # double-buffered x1 panel + x2^T panel + output tile + f32 col-norm
        est = 2 * itemsize * (tn * d + d * tm + tn * tm) + 2 * 4 * tm
        if est <= _VMEM_BUDGET or (tm_t <= 256 and tn_t <= 128):
            return tn, tm, n_pad, m_pad, est
        if tm_t > 256:
            tm_t //= 2
        else:
            tn_t //= 2


def _vmem_limit(est_bytes):
    return int(max(32 * 1024 * 1024, min(64 * 1024 * 1024, 2 * est_bytes)))


def _flatten_lead(x, lead):
    """Reshape (..., R, C) -> (B or 1, R, C) without materializing broadcasts.

    Returns (array, batched) where batched tells the BlockSpec index_map
    whether to index with the grid batch id or with 0 (broadcast)."""
    lead = tuple(int(s) for s in lead)
    B = int(np.prod(lead)) if lead else 1
    xl = tuple(int(s) for s in x.shape[:-2])
    if xl == lead:
        return x.reshape((B,) + x.shape[-2:]), True
    if int(np.prod(xl)) == 1:
        return x.reshape((1,) + x.shape[-2:]), False
    xb = jnp.broadcast_to(x, lead + x.shape[-2:])   # rare partial broadcast
    return xb.reshape((B,) + x.shape[-2:]), True


# ----------------------------------------------------------------------------
# Pallas kernels
# ----------------------------------------------------------------------------
def _dist_tile_kernel(x1_ref, x2t_ref, x2n_ref, *rest,
                      x1_eq_x2, take_sqrt, has_scale, tile_n, tile_m):
    """(TILE_N, D) x (D, TILE_M) -> (TILE_N, TILE_M) (squared) distance."""
    if has_scale:
        s_ref, o_ref = rest
    else:
        (o_ref,) = rest

    x1 = x1_ref[0]                                   # (TILE_N, D)
    if has_scale:
        x1 = x1 * s_ref[...]                         # fold lengthscale^-1
    x2t = x2t_ref[0]                                 # (D, TILE_M), pre-scaled

    # MXU matmul with the canonical contraction (rhs already transposed).
    prod = lax.dot_general(x1, x2t, (((1,), (0,)), ((), ())),
                           preferred_element_type=jnp.float32)
    # row norm computed in-kernel (f32) from the already-loaded tile
    x1f = x1.astype(jnp.float32)
    x1n = jnp.sum(x1f * x1f, axis=-1, keepdims=True)     # (TILE_N, 1)
    res = prod * (-2.0) + x1n + x2n_ref[0]               # + (1, TILE_M) f32
    res = jnp.maximum(res, 0.0)                          # clamp_min_(0)
    diag_val = jnp.float32(0.0)
    if take_sqrt:
        res = jnp.sqrt(jnp.maximum(res, 1e-30))          # clamp_min_(1e-30)
        diag_val = jnp.float32(_SQRT_EPS)

    if x1_eq_x2:
        # torch fills the diagonal with 0 *before* clamp/sqrt -> final value
        # is 0 (squared) or sqrt(1e-30) (distance).  Single store per tile:
        # masked store only where the tile intersects the diagonal.
        row0 = pl.program_id(1) * tile_n
        col0 = pl.program_id(2) * tile_m
        hits = jnp.logical_and(row0 < col0 + tile_m, col0 < row0 + tile_n)

        @pl.when(hits)
        def _store_diag_tile():
            row = lax.broadcasted_iota(jnp.int32, (tile_n, tile_m), 0) + row0
            col = lax.broadcasted_iota(jnp.int32, (tile_n, tile_m), 1) + col0
            o_ref[0] = jnp.where(row == col, diag_val, res).astype(o_ref.dtype)

        @pl.when(jnp.logical_not(hits))
        def _store_plain_tile():
            o_ref[0] = res.astype(o_ref.dtype)
    else:
        o_ref[0] = res.astype(o_ref.dtype)


def _diag_tile_kernel(x1_ref, x2_ref, o_ref, *, square_dist):
    """Row-wise ||x1 - x2|| for one (TILE_N, D) block, f32 accumulation."""
    d = x1_ref[0].astype(jnp.float32) - x2_ref[0].astype(jnp.float32)
    s = jnp.sum(d * d, axis=-1, keepdims=True)           # (TILE_N, 1)
    if not square_dist:
        s = jnp.sqrt(s)
    o_ref[0] = s.astype(o_ref.dtype)


def _outer_dist_kernel(x1_ref, x2t_ref, o_ref, *, take_sqrt):
    """batch_dims=(0,2): per-feature outer |x1[:, d] - x2[d, :]| tile.
    Pure VPU/XLU (no degenerate K=1 MXU matmul)."""
    d = pl.program_id(3)
    x1 = x1_ref[0].astype(jnp.float32)                   # (TILE_N, D)
    x2t = x2t_ref[0].astype(jnp.float32)                 # (D, TILE_M)
    lane_sel = lax.broadcasted_iota(jnp.int32, x1.shape, 1) == d
    col = jnp.sum(jnp.where(lane_sel, x1, 0.0), axis=1, keepdims=True)
    sub_sel = lax.broadcasted_iota(jnp.int32, x2t.shape, 0) == d
    row = jnp.sum(jnp.where(sub_sel, x2t, 0.0), axis=0, keepdims=True)
    diff = col - row                                     # (TILE_N, TILE_M)
    res = diff * diff
    if take_sqrt:
        res = jnp.sqrt(jnp.maximum(res, 1e-30))
    o_ref[0, 0] = res.astype(o_ref.dtype)


# ----------------------------------------------------------------------------
# Pallas wrappers
# ----------------------------------------------------------------------------
def _pallas_full_dist(x1, x2, inv_scale, *, x1_eq_x2, square_dist,
                      x1_batched, x2_batched, out_batch):
    """x1: (B1, N, D), x2: (B2, M, D) -> (out_batch, N, M)."""
    B1, N, D = x1.shape
    B2, M, _ = x2.shape
    dtype = x1.dtype
    itemsize = jnp.dtype(dtype).itemsize
    tile_n, tile_m, n_pad, m_pad, est = _choose_full_tiles(N, M, D, itemsize)

    has_scale = inv_scale is not None
    if has_scale:
        inv_scale = inv_scale.reshape(1, -1).astype(dtype)   # (1, d or 1)
        x2s = x2 * inv_scale          # fold scaling into the mandatory copy
    else:
        x2s = x2
    # One-time transposed copy of x2: lane-dense in M for the MXU rhs and the
    # column-norm row; ~M*D bytes, negligible vs the N*M output.
    x2t = jnp.swapaxes(x2s, -1, -2)                           # (B2, D, M)
    x2tf = x2t.astype(jnp.float32)
    x2n = jnp.sum(x2tf * x2tf, axis=-2, keepdims=True)        # (B2, 1, M) f32

    if n_pad > N:
        x1 = jnp.pad(x1, ((0, 0), (0, n_pad - N), (0, 0)))
    if m_pad > M:
        x2t = jnp.pad(x2t, ((0, 0), (0, 0), (0, m_pad - M)))
        x2n = jnp.pad(x2n, ((0, 0), (0, 0), (0, m_pad - M)))

    in_specs = [
        pl.BlockSpec((1, tile_n, D),
                     lambda b, i, j: (b if x1_batched else 0, i, 0)),
        pl.BlockSpec((1, D, tile_m),
                     lambda b, i, j: (b if x2_batched else 0, 0, j)),
        pl.BlockSpec((1, 1, tile_m),
                     lambda b, i, j: (b if x2_batched else 0, 0, j)),
    ]
    args = [x1, x2t, x2n]
    if has_scale:
        in_specs.append(pl.BlockSpec(inv_scale.shape, lambda b, i, j: (0, 0)))
        args.append(inv_scale)

    kernel = functools.partial(
        _dist_tile_kernel, x1_eq_x2=x1_eq_x2, take_sqrt=not square_dist,
        has_scale=has_scale, tile_n=tile_n, tile_m=tile_m)

    out = pl.pallas_call(
        kernel,
        out_shape=jax.ShapeDtypeStruct((out_batch, n_pad, m_pad), dtype),
        grid=(out_batch, n_pad // tile_n, m_pad // tile_m),
        in_specs=in_specs,
        out_specs=pl.BlockSpec((1, tile_n, tile_m), lambda b, i, j: (b, i, j)),
        compiler_params=pltpu.CompilerParams(
            dimension_semantics=("parallel", "parallel", "parallel"),
            vmem_limit_bytes=_vmem_limit(est)),
    )(*args)
    if n_pad > N or m_pad > M:
        out = out[:, :N, :M]
    return out


def _pallas_diag_dist(x1, x2, *, square_dist, x1_batched, x2_batched,
                      out_batch):
    """x1: (B1, N, D), x2: (B2, N, D) (pre-scaled) -> (out_batch, N)."""
    B1, N, D = x1.shape
    dtype = x1.dtype
    itemsize = jnp.dtype(dtype).itemsize
    sub = _sublane_align(itemsize)
    tgt = 2048
    while True:
        tile_n, n_pad = _split_dim(N, tgt, sub)
        est = 4 * tile_n * D * itemsize + 4 * tile_n * itemsize
        if est <= _VMEM_BUDGET or tgt <= sub:
            break
        tgt = max(sub, tgt // 2)
    if n_pad > N:
        pad = ((0, 0), (0, n_pad - N), (0, 0))
        x1 = jnp.pad(x1, pad)
        x2 = jnp.pad(x2, pad)
    kernel = functools.partial(_diag_tile_kernel, square_dist=square_dist)
    out = pl.pallas_call(
        kernel,
        out_shape=jax.ShapeDtypeStruct((out_batch, n_pad, 1), dtype),
        grid=(out_batch, n_pad // tile_n),
        in_specs=[pl.BlockSpec((1, tile_n, D),
                               lambda b, i: (b if x1_batched else 0, i, 0)),
                  pl.BlockSpec((1, tile_n, D),
                               lambda b, i: (b if x2_batched else 0, i, 0))],
        out_specs=pl.BlockSpec((1, tile_n, 1), lambda b, i: (b, i, 0)),
        compiler_params=pltpu.CompilerParams(
            dimension_semantics=("parallel", "parallel")),
    )(x1, x2)
    return out[:, :N, 0]


def _pallas_outer_dist(x1, x2, *, square_dist, x1_batched, x2_batched,
                       out_batch):
    """batch_dims=(0,2): x1 (B1,N,D), x2 (B2,M,D) -> (out_batch*D, N, M)."""
    B1, N, D = x1.shape
    B2, M, _ = x2.shape
    dtype = x1.dtype
    itemsize = jnp.dtype(dtype).itemsize
    tile_n, tile_m, n_pad, m_pad, est = _choose_full_tiles(N, M, D, itemsize)

    x2t = jnp.swapaxes(x2, -1, -2)                            # (B2, D, M)
    if n_pad > N:
        x1 = jnp.pad(x1, ((0, 0), (0, n_pad - N), (0, 0)))
    if m_pad > M:
        x2t = jnp.pad(x2t, ((0, 0), (0, 0), (0, m_pad - M)))

    kernel = functools.partial(_outer_dist_kernel, take_sqrt=not square_dist)
    out = pl.pallas_call(
        kernel,
        out_shape=jax.ShapeDtypeStruct((out_batch, D, n_pad, m_pad), dtype),
        # d innermost: x1/x2 blocks stay resident while only the output slice
        # changes, so inputs are fetched once per (i, j) pair.
        grid=(out_batch, n_pad // tile_n, m_pad // tile_m, D),
        in_specs=[
            pl.BlockSpec((1, tile_n, D),
                         lambda b, i, j, d: (b if x1_batched else 0, i, 0)),
            pl.BlockSpec((1, D, tile_m),
                         lambda b, i, j, d: (b if x2_batched else 0, 0, j)),
        ],
        out_specs=pl.BlockSpec((1, 1, tile_n, tile_m),
                               lambda b, i, j, d: (b, d, i, j)),
        compiler_params=pltpu.CompilerParams(
            dimension_semantics=("parallel", "parallel", "parallel",
                                 "parallel"),
            vmem_limit_bytes=_vmem_limit(est)),
    )(x1, x2t)
    if n_pad > N or m_pad > M:
        out = out[:, :, :N, :M]
    return out.reshape(out_batch * D, N, M)


# ----------------------------------------------------------------------------
# Kernel module (parameters, active_dims, batching, diag / batch_dims glue)
# ----------------------------------------------------------------------------
class Kernel:
    def __init__(self, has_lengthscale=False, ard_num_dims=None,
                 batch_shape=(1,), active_dims=None, eps=1e-6):
        self.active_dims = (None if active_dims is None
                            else jnp.asarray(active_dims, jnp.int32))
        self.ard_num_dims = ard_num_dims
        self.batch_shape = tuple(batch_shape)
        self._has_lengthscale = has_lengthscale
        self.eps = eps
        if has_lengthscale:
            num = 1 if ard_num_dims is None else ard_num_dims
            # torch init: raw_lengthscale = zeros(*batch_shape, 1, num)
            self.raw_lengthscale = jnp.zeros((*self.batch_shape, 1, num),
                                             jnp.float32)
        else:
            self.raw_lengthscale = None

    @property
    def has_lengthscale(self):
        return self._has_lengthscale

    @property
    def lengthscale(self):
        if not self._has_lengthscale:
            return None
        return jnp.clip(jax.nn.softplus(self.raw_lengthscale), self.eps, 1e5)

    def forward(self, x1, x2, diag=False, batch_dims=None, **params):
        raise NotImplementedError()

    # ------------------------- _covar_dist -------------------------------
    def _covar_dist(self, x1, x2, diag=False, batch_dims=None,
                    square_dist=False,
                    dist_postprocess_func=default_postprocess,
                    postprocess=True, inv_scale=None, x1_eq_x2=None, **params):
        # Static symmetry flag: object identity (x2 is x1) replaces
        # torch.equal so there is no host sync and the path is jittable.
        # TODO(synk): value-equal-but-distinct x1/x2 is treated as asymmetric.
        same = (x2 is x1) if x1_eq_x2 is None else bool(x1_eq_x2)
        if x1.ndim == 2:
            x1 = x1[None]
            x2 = x1 if same else x2[None]
        d_feat = x1.shape[-1]

        if batch_dims == (0, 2):
            if inv_scale is not None:
                sc = inv_scale.reshape((1,) * (x1.ndim - 1) + (-1,))
                sc = sc.astype(x1.dtype)
                x1 = x1 * sc
                x2 = x1 if same else x2 * sc
            if diag:
                if same:
                    res = jnp.zeros((d_feat, x2.shape[-2]), x1.dtype)
                    return dist_postprocess_func(res) if postprocess else res
                dd = x1 - x2
                r = dd * dd if square_dist else jnp.abs(dd)
                r = jnp.swapaxes(r, -1, -2)           # (..., d, n), tiny
                if postprocess:
                    r = dist_postprocess_func(r)
                return r.reshape((-1, r.shape[-1]))
            lead = jnp.broadcast_shapes(x1.shape[:-2], x2.shape[:-2])
            x1f, bb1 = _flatten_lead(x1, lead)
            x2f, bb2 = _flatten_lead(x2, lead)
            flat_b = int(np.prod(lead)) if lead else 1
            res = _pallas_outer_dist(x1f, x2f, square_dist=square_dist,
                                     x1_batched=bb1, x2_batched=bb2,
                                     out_batch=flat_b)  # (flat_b*d, n, m)
            if postprocess:
                res = dist_postprocess_func(res)
            return res

        if diag:
            if same:
                res = jnp.zeros((x1.shape[0], x2.shape[-2]), x1.dtype)
                return dist_postprocess_func(res) if postprocess else res
            if inv_scale is not None:
                sc = inv_scale.reshape((1,) * (x1.ndim - 1) + (-1,))
                x1 = x1 * sc.astype(x1.dtype)
                x2 = x2 * sc.astype(x2.dtype)
            if x1.shape[-2:] != x2.shape[-2:]:
                # rare broadcast beyond batch dims: plain XLA fallback
                diff = (x1 - x2).astype(jnp.float32)
                res = jnp.sum(diff * diff, axis=-1)
                if not square_dist:
                    res = jnp.sqrt(res)
                res = res.astype(x1.dtype)
            else:
                lead = jnp.broadcast_shapes(x1.shape[:-2], x2.shape[:-2])
                x1f, bb1 = _flatten_lead(x1, lead)
                x2f, bb2 = _flatten_lead(x2, lead)
                flat_b = int(np.prod(lead)) if lead else 1
                r = _pallas_diag_dist(x1f, x2f, square_dist=square_dist,
                                      x1_batched=bb1, x2_batched=bb2,
                                      out_batch=flat_b)
                res = r.reshape(tuple(lead) + (x1.shape[-2],))
            if postprocess:
                res = dist_postprocess_func(res)
            return res

        # full matrix path
        lead = jnp.broadcast_shapes(x1.shape[:-2], x2.shape[:-2])
        x1f, bb1 = _flatten_lead(x1, lead)
        x2f, bb2 = _flatten_lead(x2, lead)
        flat_b = int(np.prod(lead)) if lead else 1
        res = _pallas_full_dist(x1f, x2f, inv_scale, x1_eq_x2=same,
                                square_dist=square_dist, x1_batched=bb1,
                                x2_batched=bb2, out_batch=flat_b)
        res = res.reshape(tuple(lead) + res.shape[-2:])
        if postprocess:
            res = dist_postprocess_func(res)
        return res

    # --------------------------- __call__ ---------------------------------
    def __call__(self, x1, x2=None, diag=False, batch_dims=None, **params):
        same = (x2 is None) or (x2 is x1)
        x1_ = x1
        if self.active_dims is not None:
            x1_ = jnp.take(x1_, self.active_dims, axis=-1)
        if x1_.ndim == 1:
            x1_ = x1_[:, None]
        if same:
            x2_ = None
        else:
            x2_ = x2
            if self.active_dims is not None:
                x2_ = jnp.take(x2_, self.active_dims, axis=-1)
            if x2_.ndim == 1:
                x2_ = x2_[:, None]
            if x1_.shape[-1] != x2_.shape[-1]:
                raise RuntimeError(
                    "x1_ and x2_ must have the same number of dimensions!")
        is_batch = x1_.ndim > 2
        if not is_batch:
            x1_ = x1_[None]
            if x2_ is not None:
                x2_ = x2_[None]
        if x2_ is None:
            x2_ = x1_          # identity preserved -> static symmetric flag
        res = self.forward(x1_, x2_, diag=diag, batch_dims=batch_dims, **params)
        if not is_batch and res.shape[0] == 1:   # torch .squeeze(0)
            res = res[0]
        return res

    def __add__(self, other):
        return AdditiveKernel(self, other)

    def __mul__(self, other):
        return ProductKernel(self, other)


class EuclideanDistanceKernel(Kernel):
    """Concrete Kernel (base forward is abstract): lengthscale-scaled
    Euclidean distance matrix, i.e. the canonical _covar_dist hot path."""

    def forward(self, x1, x2, diag=False, batch_dims=None, **params):
        inv_scale = None
        if self.has_lengthscale:
            ls = self.lengthscale                 # (*batch_shape, 1, d)
            if all(int(s) == 1 for s in ls.shape[:-1]):
                # fold the scaling into the Pallas kernel (no HBM copies)
                inv_scale = 1.0 / ls.reshape(1, -1)
            else:
                samep = x2 is x1
                x1 = x1 / ls
                x2 = x1 if samep else x2 / ls
        return self._covar_dist(x1, x2, diag=diag, batch_dims=batch_dims,
                                square_dist=False, postprocess=True,
                                inv_scale=inv_scale, **params)


class AdditiveKernel(Kernel):
    def __init__(self, *kernels):
        super().__init__()
        self.kernels = list(kernels)

    def forward(self, x1, x2, **params):
        res = None
        for kern in self.kernels:
            term = kern(x1, x2, **params)
            res = term if res is None else res + term
        return res


class ProductKernel(Kernel):
    def __init__(self, *kernels):
        super().__init__()
        self.kernels = list(kernels)

    def forward(self, x1, x2, **params):
        res = None
        for kern in self.kernels:
            term = kern(x1, x2, **params)
            res = term if res is None else res * term
        return res


# ----------------------------------------------------------------------------
# Plain-JAX reference (mirrors Distance._jit_dist) for verification
# ----------------------------------------------------------------------------
def ref_dist(a, b, a_eq_b, square):
    a_norm = jnp.sum(a * a, axis=-1, keepdims=True)
    b_norm = a_norm if a_eq_b else jnp.sum(b * b, axis=-1, keepdims=True)
    res = jnp.matmul(a, b.T) * (-2.0) + b_norm.T + a_norm
    if a_eq_b:
        eye = jnp.eye(res.shape[-1], dtype=bool)
        res = jnp.where(eye, 0.0, res)
    res = jnp.maximum(res, 0.0)
    if not square:
        res = jnp.sqrt(jnp.maximum(res, 1e-30))
    return res


def ref_eval(kern, x1, x2=None):
    x1_ = (jnp.take(x1, kern.active_dims, axis=-1)
           if kern.active_dims is not None else x1)
    if x2 is None:
        x2_, eq = x1_, True
    else:
        x2_ = (jnp.take(x2, kern.active_dims, axis=-1)
               if kern.active_dims is not None else x2)
        eq = False
    ls = kern.lengthscale.reshape(1, -1)
    return ref_dist(x1_ / ls, x2_ / ls, eq, square=False)


if __name__ == "__main__":
    key = jax.random.PRNGKey(0)
    k_a, k_b = jax.random.split(key)
    n, m, d = 16, 8, 8
    x1 = jax.random.normal(k_a, (n, d), jnp.float32)
    x2 = jax.random.normal(k_b, (m, d), jnp.float32)

    k1 = EuclideanDistanceKernel(has_lengthscale=True, ard_num_dims=4,
                                 active_dims=jnp.arange(0, 4))
    k2 = EuclideanDistanceKernel(has_lengthscale=True, ard_num_dims=4,
                                 active_dims=jnp.arange(4, 8))
    # deterministic non-trivial raw lengthscales (pre-softplus)
    k1.raw_lengthscale = jnp.full((1, 1, 4), 0.25, jnp.float32)
    k2.raw_lengthscale = jnp.linspace(-0.5, 0.5, 4,
                                      dtype=jnp.float32).reshape(1, 1, 4)

    rtol, atol = 5e-2, 5e-2

    # 1) symmetric case (x2 = None): diag is sqrt(1e-30) ~ 1e-15 (torch semantics)
    K11 = jax.block_until_ready(k1(x1))
    np.testing.assert_allclose(np.asarray(K11), np.asarray(ref_eval(k1, x1)),
                               rtol=rtol, atol=atol)
    assert float(jnp.max(jnp.abs(jnp.diag(K11)))) < 1e-6

    # 1b) same computation under jit (no host sync / concretization errors)
    K11_jit = jax.block_until_ready(jax.jit(lambda a: k1(a))(x1))
    np.testing.assert_allclose(np.asarray(K11_jit), np.asarray(K11),
                               rtol=1e-4, atol=1e-4)

    # 2) cross covariance
    K12 = jax.block_until_ready(k1(x1, x2))
    np.testing.assert_allclose(np.asarray(K12),
                               np.asarray(ref_eval(k1, x1, x2)),
                               rtol=rtol, atol=atol)

    # 3) AdditiveKernel / ProductKernel
    Kadd = jax.block_until_ready((k1 + k2)(x1, x2))
    Kprod = jax.block_until_ready((k1 * k2)(x1, x2))
    np.testing.assert_allclose(
        np.asarray(Kadd),
        np.asarray(ref_eval(k1, x1, x2) + ref_eval(k2, x1, x2)),
        rtol=rtol, atol=atol)
    np.testing.assert_allclose(
        np.asarray(Kprod),
        np.asarray(ref_eval(k1, x1, x2) * ref_eval(k2, x1, x2)),
        rtol=rtol, atol=atol)

    # 4) diag modes
    d_eq = jax.block_until_ready(k1(x1, diag=True))
    assert d_eq.shape == (n,) and bool(jnp.all(d_eq == 0.0))
    x1b = x1 + 0.5
    d_ne = jax.block_until_ready(k1(x1, x1b, diag=True))
    a = jnp.take(x1, k1.active_dims, axis=-1) / k1.lengthscale.reshape(1, -1)
    b = jnp.take(x1b, k1.active_dims, axis=-1) / k1.lengthscale.reshape(1, -1)
    np.testing.assert_allclose(np.asarray(d_ne),
                               np.asarray(jnp.sqrt(jnp.sum((a - b) ** 2, -1))),
                               rtol=1e-3, atol=1e-4)

    # 5) batch_dims=(0, 2): one n x m slice per (active) input dimension
    Kbd = jax.block_until_ready(k1(x1, x2, batch_dims=(0, 2)))
    assert Kbd.shape == (4, n, m)
    abd = jnp.take(x1, k1.active_dims, axis=-1) / k1.lengthscale.reshape(1, -1)
    bbd = jnp.take(x2, k1.active_dims, axis=-1) / k1.lengthscale.reshape(1, -1)
    bd_ref = jnp.abs(abd.T[:, :, None] - bbd.T[:, None, :])
    np.testing.assert_allclose(np.asarray(Kbd), np.asarray(bd_ref),
                               rtol=rtol, atol=atol)

    # TODO(synk): LazyTensor-style lazy evaluation is not reproduced; kernel
    # matrices are always materialized densely.
    print("KERNEL_OK")
</pallas_src>

<mosaic_0001>
module attributes {stable_mosaic.version = 11 : i64} {
  func.func @_dist_tile_kernel(%arg0: i32, %arg1: i32, %arg2: i32, %arg3: memref<1x16x4xf32, #tpu.memory_space<vmem>>, %arg4: memref<1x4x128xf32, #tpu.memory_space<vmem>>, %arg5: memref<1x1x128xf32, #tpu.memory_space<vmem>>, %arg6: memref<1x4xf32, #tpu.memory_space<vmem>>, %arg7: memref<1x16x128xf32, #tpu.memory_space<vmem>>) attributes {dimension_semantics = [#tpu.dimension_semantics<parallel>, #tpu.dimension_semantics<parallel>, #tpu.dimension_semantics<parallel>], iteration_bounds = array<i64: 1, 1, 1>, scalar_prefetch = 0 : i64, scratch_operands = 0 : i64, tpu.core_type = #tpu.core_type<tc>, window_params = [{transform_indices = @transform_0, window_bounds = array<i64: 1, 16, 4>}, {transform_indices = @transform_1, window_bounds = array<i64: 1, 4, 128>}, {transform_indices = @transform_2, window_bounds = array<i64: 1, 1, 128>}, {pipeline_mode = #tpu.pipeline_mode<synchronous>, transform_indices = @transform_3, window_bounds = array<i64: 1, 4>}, {transform_indices = @transform_4, window_bounds = array<i64: 1, 16, 128>}]} {
    %c0 = arith.constant 0 : index
    %c0_0 = arith.constant 0 : index
    %c0_1 = arith.constant 0 : index
    %0 = vector.load %arg3[%c0, %c0_0, %c0_1] : memref<1x16x4xf32, #tpu.memory_space<vmem>>, vector<1x16x4xf32>
    %1 = vector.shape_cast %0 : vector<1x16x4xf32> to vector<16x4xf32>
    %c0_2 = arith.constant 0 : index
    %c0_3 = arith.constant 0 : index
    %2 = vector.load %arg6[%c0_2, %c0_3] : memref<1x4xf32, #tpu.memory_space<vmem>>, vector<1x4xf32>
    %3 = vector.broadcast %2 : vector<1x4xf32> to vector<16x4xf32>
    %4 = arith.mulf %1, %3 : vector<16x4xf32>
    %c0_4 = arith.constant 0 : index
    %c0_5 = arith.constant 0 : index
    %c0_6 = arith.constant 0 : index
    %5 = vector.load %arg4[%c0_4, %c0_5, %c0_6] : memref<1x4x128xf32, #tpu.memory_space<vmem>>, vector<1x4x128xf32>
    %6 = vector.shape_cast %5 : vector<1x4x128xf32> to vector<4x128xf32>
    %cst = arith.constant dense<0.000000e+00> : vector<16x128xf32>
    %7 = tpu.matmul %4, %6, %cst {dimension_numbers = #tpu.dot_dimension_numbers<[1], [0], [0], [1], [0, 0, 1, 1], [], []>} : vector<16x4xf32>, vector<4x128xf32>, vector<16x128xf32> -> vector<16x128xf32>
    %8 = arith.mulf %4, %4 : vector<16x4xf32>
    %cst_7 = arith.constant dense<0.000000e+00> : vector<16xf32>
    %9 = vector.multi_reduction <add>, %8, %cst_7 [1] : vector<16x4xf32> to vector<16xf32>
    %10 = vector.shape_cast %9 : vector<16xf32> to vector<16x1xf32>
    %cst_8 = arith.constant -2.000000e+00 : f32
    %11 = vector.broadcast %cst_8 : f32 to vector<16x128xf32>
    %12 = arith.mulf %7, %11 : vector<16x128xf32>
    %13 = vector.broadcast %10 : vector<16x1xf32> to vector<16x128xf32>
    %14 = arith.addf %12, %13 : vector<16x128xf32>
    %c0_9 = arith.constant 0 : index
    %c0_10 = arith.constant 0 : index
    %c0_11 = arith.constant 0 : index
    %15 = vector.load %arg5[%c0_9, %c0_10, %c0_11] : memref<1x1x128xf32, #tpu.memory_space<vmem>>, vector<1x1x128xf32>
    %16 = vector.shape_cast %15 : vector<1x1x128xf32> to vector<1x128xf32>
    %17 = vector.broadcast %16 : vector<1x128xf32> to vector<16x128xf32>
    %18 = arith.addf %14, %17 : vector<16x128xf32>
    %cst_12 = arith.constant 0.000000e+00 : f32
    %19 = vector.broadcast %cst_12 : f32 to vector<16x128xf32>
    %20 = arith.maximumf %18, %19 : vector<16x128xf32>
    %cst_13 = arith.constant 1.000000e-30 : f32
    %21 = vector.broadcast %cst_13 : f32 to vector<16x128xf32>
    %22 = arith.maximumf %20, %21 : vector<16x128xf32>
    %23 = math.sqrt %22 : vector<16x128xf32>
    %c16_i32 = arith.constant 16 : i32
    %24 = arith.muli %arg1, %c16_i32 : i32
    %c128_i32 = arith.constant 128 : i32
    %25 = arith.muli %arg2, %c128_i32 : i32
    %c128_i32_14 = arith.constant 128 : i32
    %26 = arith.addi %25, %c128_i32_14 : i32
    %27 = arith.cmpi slt, %24, %26 : i32
    %c16_i32_15 = arith.constant 16 : i32
    %28 = arith.addi %24, %c16_i32_15 : i32
    %29 = arith.cmpi slt, %25, %28 : i32
    %30 = arith.andi %27, %29 : i1
    %31 = arith.extui %30 : i1 to i32
    %cst_16 = arith.constant 1.000000e-15 : f32
    %c0_i32 = arith.constant 0 : i32
    %32 = arith.cmpi ne, %31, %c0_i32 : i32
    scf.if %32 {
      %36 = tpu.iota {dimensions = array<i32: 0>} : vector<16x128xi32>
      %37 = vector.broadcast %24 : i32 to vector<16x128xi32>
      %38 = arith.addi %36, %37 : vector<16x128xi32>
      %39 = tpu.iota {dimensions = array<i32: 1>} : vector<16x128xi32>
      %40 = vector.broadcast %25 : i32 to vector<16x128xi32>
      %41 = arith.addi %39, %40 : vector<16x128xi32>
      %42 = arith.cmpi eq, %38, %41 : vector<16x128xi32>
      %43 = vector.broadcast %cst_16 : f32 to vector<16x128xf32>
      %44 = arith.select %42, %43, %23 : vector<16x128xi1>, vector<16x128xf32>
      %c0_18 = arith.constant 0 : index
      %c0_19 = arith.constant 0 : index
      %c0_20 = arith.constant 0 : index
      %45 = vector.load %arg7[%c0_18, %c0_19, %c0_20] : memref<1x16x128xf32, #tpu.memory_space<vmem>>, vector<1x16x128xf32>
      %46 = vector.shape_cast %45 : vector<1x16x128xf32> to vector<16x128xf32>
      %47 = vector.shape_cast %44 : vector<16x128xf32> to vector<1x16x128xf32>
      tpu.vector_store %arg7[%c0_18, %c0_19, %c0_20], %47 {strides = array<i32>} : memref<1x16x128xf32, #tpu.memory_space<vmem>>, vector<1x16x128xf32>,
    } else {
    }
    %true = arith.constant true
    %33 = arith.xori %30, %true : i1
    %34 = arith.extui %33 : i1 to i32
    %c0_i32_17 = arith.constant 0 : i32
    %35 = arith.cmpi ne, %34, %c0_i32_17 : i32
    scf.if %35 {
      %c0_18 = arith.constant 0 : index
      %c0_19 = arith.constant 0 : index
      %c0_20 = arith.constant 0 : index
      %36 = vector.load %arg7[%c0_18, %c0_19, %c0_20] : memref<1x16x128xf32, #tpu.memory_space<vmem>>, vector<1x16x128xf32>
      %37 = vector.shape_cast %36 : vector<1x16x128xf32> to vector<16x128xf32>
      %38 = vector.shape_cast %23 : vector<16x128xf32> to vector<1x16x128xf32>
      tpu.vector_store %arg7[%c0_18, %c0_19, %c0_20], %38 {strides = array<i32>} : memref<1x16x128xf32, #tpu.memory_space<vmem>>, vector<1x16x128xf32>,
    } else {
    }
    return
  }
  func.func @transform_0(%arg0: i32, %arg1: i32, %arg2: i32) -> (i32, i32, i32) {
    %c0_i32 = arith.constant 0 : i32
    %c0_i32_0 = arith.constant 0 : i32
    return %arg0, %arg1, %c0_i32 : i32, i32, i32
  }
  func.func @transform_1(%arg0: i32, %arg1: i32, %arg2: i32) -> (i32, i32, i32) {
    %c0_i32 = arith.constant 0 : i32
    %c0_i32_0 = arith.constant 0 : i32
    return %arg0, %c0_i32, %arg2 : i32, i32, i32
  }
  func.func @transform_2(%arg0: i32, %arg1: i32, %arg2: i32) -> (i32, i32, i32) {
    %c0_i32 = arith.constant 0 : i32
    %c0_i32_0 = arith.constant 0 : i32
    return %arg0, %c0_i32, %arg2 : i32, i32, i32
  }
  func.func @transform_3(%arg0: i32, %arg1: i32, %arg2: i32) -> (i32, i32) {
    %c0_i32 = arith.constant 0 : i32
    %c0_i32_0 = arith.constant 0 : i32
    %c0_i32_1 = arith.constant 0 : i32
    return %c0_i32, %c0_i32_0 : i32, i32
  }
  func.func @transform_4(%arg0: i32, %arg1: i32, %arg2: i32) -> (i32, i32, i32) {
    %c0_i32 = arith.constant 0 : i32
    return %arg0, %arg1, %arg2 : i32, i32, i32
  }
}

</mosaic_0001>

<llo_original>
// kernel: tpu_custom_call.1
$region0: #{tpu_custom_call.1}
  #allocation0 [shape = 'u32[]', space=smem, size = 0x4, offset = 0x4, fixed_abs, tag = 'smem constant byte address 0x4 - core index']
  #allocation1 [shape = 'u32[144,128]{1,0:T(1,128)}', space=vmem, size = 0x12000, scoped, tag = 'internal scratch']
  %s0 = inlined_call_operand.vmem [shape: f32[1,16,4], index: 0, kind: input, shape index: {}]
  %s1 = inlined_call_operand.vmem [shape: f32[1,4,128], index: 1, kind: input, shape index: {}]
  %s2 = inlined_call_operand.vmem [shape: f32[1,1,128], index: 2, kind: input, shape index: {}]
  %s3 = inlined_call_operand.vmem [shape: f32[1,4], index: 3, kind: input, shape index: {}]
  %s4 = inlined_call_operand.hbm [shape: f32[1,16,128], index: 4, kind: output, shape index: {}]
  %s5 = sld [smem:[#allocation0]]
  $region34: #{tpu_custom_call.1} parent=0
    _
  %s7 = ssub.s32 1, %s5
  %s8 = scalar_select 0, %s7, %s5
  $region1: #{tpu_custom_call.1} parent=0
    #allocation2 [shape = 'u8[8192]{0}', space=vmem, size = 0x2000, scoped, tag = 'output window, operand 0, single buffered']
    #allocation3 [shape = 's32[1]{0}', space=sflag, size = 0x4, scoped, tag = 'scoped memory for tpu_custom_call.1']
    %9 = vsyncpa [#allocation3], 0
    // Predicated region
    $region2: #{tpu_custom_call.1} parent=1 // pred_check
      _
    $region3: #{tpu_custom_call.1} parent=1 // pred_check_branch
      %11 = sbr.rel (0) target = $region5
    $region4: #{tpu_custom_call.1} parent=1 // pred_region
      _
    $region5: #{tpu_custom_call.1} parent=1 // pred_fallthru
      _
    // Predicated region
    $region6: #{tpu_custom_call.1} parent=1 // pred_check
      _
    $region7: #{tpu_custom_call.1} parent=1 // pred_check_branch
      %13 = sbr.rel (0) target = $region9
    $region8: #{tpu_custom_call.1} parent=1 // pred_region
      _
    $region9: #{tpu_custom_call.1} parent=1 // pred_fallthru
      _
    // Predicated region
    $region10: #{tpu_custom_call.1} parent=1 // pred_check
      _
    $region11: #{tpu_custom_call.1} parent=1 // pred_check_branch
      %15 = sbr.rel (0) target = $region13
    $region12: #{tpu_custom_call.1} parent=1 // pred_region
      _
    $region13: #{tpu_custom_call.1} parent=1 // pred_fallthru
      _
    // Predicated region
    $region14: #{tpu_custom_call.1} parent=1 // pred_check
      _
    $region15: #{tpu_custom_call.1} parent=1 // pred_check_branch
      %17 = sbr.rel (0) target = $region17
    $region16: #{tpu_custom_call.1} parent=1 // pred_region
      _
    $region17: #{tpu_custom_call.1} parent=1 // pred_fallthru
      _
    %v18 = vld [vmem:[%s0] sm:$0xff]
    %v19 = vld [vmem:[%s0 + $0x8] sm:$0xff]
    %v20 = vld [vmem:[%s3] sm:$0x1]
    %v22 = vlaneseq
    %v23 = vshrl.u32 %v22, 7
    %v24 = vsub.s32 0, %v23
    %v25 = vrot.slane %v20, %v24
    %v27 = vmul.f32 %v18, %v25
    %v28 = vmul.f32 %v19, %v25
    %v29 = vld [vmem:[%s1] sm:$0xf]
    %vm30 = vcmask 31744
    %v32 = vsel %vm30, %v27, 0
    %v35 = vsel %vm30, %v28, 0
    %vm37 = vcmask 1043456
    %v39 = vsel %vm37, %v29, 0
    %41 = vmatprep.subr.mxu0 0.0
    %42 = vmatpush1.msra.mxu0 %v39
    %43 = vmatprep.subr.mxu0 0.0
    %44 = vmatpush1.msra.mxu0 0.0
    %45 = vmatprep.subr.mxu0 0.0
    %46 = vmatpush1.msra.mxu0 0.0
    %47 = vmatprep.subr.mxu0 0.0
    %48 = vmatpush1.msra.mxu0 0.0
    %49 = vmatprep.subr.mxu0 0.0
    %50 = vmatpush1.msra.mxu0 0.0
    %51 = vmatprep.subr.mxu0 0.0
    %52 = vmatpush1.msra.mxu0 0.0
    %53 = vmatprep.subr.mxu0 0.0
    %54 = vmatpush1.msra.mxu0 0.0
    %55 = vmatprep.subr.mxu0 0.0
    %56 = vmatpush1.msra.mxu0 0.0
    %57 = vmatprep.subr.mxu0 0.0
    %58 = vmatpush1.msra.mxu0 0.0
    %59 = vmatprep.subr.mxu0 0.0
    %60 = vmatpush1.msra.mxu0 0.0
    %61 = vmatprep.subr.mxu0 0.0
    %62 = vmatpush1.msra.mxu0 0.0
    %63 = vmatprep.subr.mxu0 0.0
    %64 = vmatpush1.msra.mxu0 0.0
    %65 = vmatprep.subr.mxu0 0.0
    %66 = vmatpush1.msra.mxu0 0.0
    %67 = vmatprep.subr.mxu0 0.0
    %68 = vmatpush1.msra.mxu0 0.0
    %69 = vmatprep.subr.mxu0 0.0
    %70 = vmatpush1.msra.mxu0 0.0
    %71 = vmatprep.subr.mxu0 0.0
    %72 = vmatpush1.msra.mxu0 0.0
    %73 = vmatprep.subr.mxu0 0.0
    %74 = vmatpush1.msra.mxu0 0.0
    %75 = vmatprep.subr.mxu0 0.0
    %76 = vmatpush1.msra.mxu0 0.0
    %77 = vmatprep.subr.mxu0 0.0
    %78 = vmatpush1.msra.mxu0 0.0
    %79 = vmatprep.subr.mxu0 0.0
    %80 = vmatpush1.msra.mxu0 0.0
    %81 = vmatprep.subr.mxu0 0.0
    %82 = vmatpush1.msra.mxu0 0.0
    %83 = vmatprep.subr.mxu0 0.0
    %84 = vmatpush1.msra.mxu0 0.0
    %85 = vmatprep.subr.mxu0 0.0
    %86 = vmatpush1.msra.mxu0 0.0
    %87 = vmatprep.subr.mxu0 0.0
    %88 = vmatpush1.msra.mxu0 0.0
    %89 = vmatprep.subr.mxu0 0.0
    %90 = vmatpush1.msra.mxu0 0.0
    %91 = vmatprep.subr.mxu0 0.0
    %92 = vmatpush1.msra.mxu0 0.0
    %93 = vmatprep.subr.mxu0 0.0
    %94 = vmatpush1.msra.mxu0 0.0
    %95 = vmatprep.subr.mxu0 0.0
    %96 = vmatpush1.msra.mxu0 0.0
    %97 = vmatprep.subr.mxu0 0.0
    %98 = vmatpush1.msra.mxu0 0.0
    %99 = vmatprep.subr.mxu0 0.0
    %100 = vmatpush1.msra.mxu0 0.0
    %101 = vmatprep.subr.mxu0 0.0
    %102 = vmatpush1.msra.mxu0 0.0
    %103 = vmatprep.subr.mxu0 0.0
    %104 = vmatpush1.msra.mxu0 0.0
    %105 = vmatprep.mubr.f32.mxu0 0.0
    %106 = vmatmul.mubr.f32.gmra.mrb[0].mxu0 %v32
    %v107 = vpop.f32.mrb[0].mxu0
    %v108 = vadd.f32 0.0, %v107
    %v109 = vpop.f32.mrb[0].mxu0
    %110 = vmatprep.mubr.f32.mxu0 0.0
    %111 = vmatmul.mubr.f32.gmra.mrb[0].mxu0 %v35
    %v112 = vpop.f32.mrb[0].mxu0
    %v113 = vadd.f32 0.0, %v112
    %v114 = vpop.f32.mrb[0].mxu0
    %115 = vdwg.mxu0
    %v116 = vmul.f32 %v27, %v27
    %v117 = vmul.f32 %v28, %v28
    %v118 = vsel %vm30, %v116, 0.0
    %119 = vadd.xlane.f32.xlu0 %v118
    %v120 = vpop.xlane.xlu0 %119
    %v121 = vsel %vm30, %v117, 0.0
    %122 = vadd.xlane.f32.xlu0 %v121
    %v123 = vpop.xlane.xlu0 %122
    %v124 = vmul.f32 %v108, -2.0
    %v125 = vmul.f32 %v113, -2.0
    %v126 = vadd.f32 %v124, %v120
    %v127 = vadd.f32 %v125, %v123
    %v128 = vld [vmem:[%s2] sm:$0x1]
    %v130 = vlaneseq
    %v131 = vshrl.u32 %v130, 7
    %v132 = vsub.s32 0, %v131
    %v133 = vrot.slane %v128, %v132
    %v135 = vadd.f32 %v126, %v133
    %v136 = vadd.f32 %v127, %v133
    %v137 = vmax.f32 %v135, 0.0
    %v138 = vmax.f32 %v136, 0.0
    %v139 = vmax.f32 %v137, 1e-30
    %v140 = vmax.f32 %v138, 1e-30
    %v141 = vrsqrt.pop %v139
    %v142 = vmul.f32 %v139, %v141
    %vm143 = vcmp.eq.f32.partialorder %v139, inf
    %v144 = vsel %vm143, %v139, %v142
    %vm145 = vcmp.eq.f32.partialorder %v139, 0.0
    %v146 = vand.u32 %v139, 2147483648
    %v147 = vsel %vm145, %v146, %v144
    %v148 = vrsqrt.pop %v140
    %v149 = vmul.f32 %v140, %v148
    %vm150 = vcmp.eq.f32.partialorder %v140, inf
    %v151 = vsel %vm150, %v140, %v149
    %vm152 = vcmp.eq.f32.partialorder %v140, 0.0
    %v153 = vand.u32 %v140, 2147483648
    %v154 = vsel %vm152, %v153, %v151
    %s155 = smul.u32 0, 16
    %s156 = smul.u32 0, 128
    %s157 = sadd.s32 %s156, 128
    %p158 = scmp.lt.s32.totalorder %s155, %s157
    %s159 = sadd.s32 %s155, 16
    %p160 = scmp.lt.s32.totalorder %s156, %s159
    %p161 = pnand %p158, %p160
    %p162 = pneg %p161
    // Predicated region
    $region18: #{tpu_custom_call.1} parent=1 // pred_check
      _
    $region19: #{tpu_custom_call.1} parent=1 // pred_check_branch
      %164 = sbr.rel (%p161) target = $region21
    $region20: #{tpu_custom_call.1} parent=1 // pred_region
      %v165 = vlaneseq
      %v166 = vshrl.u32 %v165, 7
      %v167 = vadd.s32 %v166, 8
      %v168 = vstv %s155
      %v169 = vadd.s32 %v166, %v168
      %v170 = vadd.s32 %v167, %v168
      %v171 = vlaneseq
      %v172 = vand.u32 %v171, 127
      %v173 = vstv %s156
      %v174 = vadd.s32 %v172, %v173
      %vm175 = vcmp.eq.s32.totalorder %v169, %v174
      %vm176 = vcmp.eq.s32.totalorder %v170, %v174
      %v177 = vsel %vm175, 1e-15, %v147
      %v178 = vsel %vm176, 1e-15, %v154
      %179 = vst [vmem:[#allocation2] sm:$0xff] %v177
      %180 = vst [vmem:[#allocation2 + $0x8] sm:$0xff] %v178
    $region21: #{tpu_custom_call.1} parent=1 // pred_fallthru
      _
    %p181 = pneg %p162
    // Predicated region
    $region22: #{tpu_custom_call.1} parent=1 // pred_check
      _
    $region23: #{tpu_custom_call.1} parent=1 // pred_check_branch
      %183 = sbr.rel (%p162) target = $region25
    $region24: #{tpu_custom_call.1} parent=1 // pred_region
      %184 = vst [vmem:[#allocation2] sm:$0xff] %v147
      %185 = vst [vmem:[#allocation2 + $0x8] sm:$0xff] %v154
    $region25: #{tpu_custom_call.1} parent=1 // pred_fallthru
      _
    // Predicated region
    $region26: #{tpu_custom_call.1} parent=1 // pred_check
      _
    $region27: #{tpu_custom_call.1} parent=1 // pred_check_branch
      %187 = sbr.rel (0) target = $region29
    $region28: #{tpu_custom_call.1} parent=1 // pred_region
      %s189 = ssub.s32 256, 256
      %190 = vsyncadd [#allocation3], %s189
      %s191 = sshll.u32 [#allocation2], 4
      %s192 = int_to_ptr.vmem [resolvable:$true] %s191
      %197 = dma.vmem_to_hbm [thread:$0]  %s192, 256, %s4, [#allocation3], 128, 128, 8
    $region29: #{tpu_custom_call.1} parent=1 // pred_fallthru
      _
    // Predicated region
    $region30: #{tpu_custom_call.1} parent=1 // pred_check
      _
    $region31: #{tpu_custom_call.1} parent=1 // pred_check_branch
      %199 = sbr.rel (0) target = $region33
    $region32: #{tpu_custom_call.1} parent=1 // pred_region
      %200 = dma.done [#allocation3], 256
    $region33: #{tpu_custom_call.1} parent=1 // pred_fallthru
      _
    %201 = vsyncpa [#allocation3], 1

</llo_original>
